<compile_context>
chip_gen: v5e
topology: v5e:2x2
jax: 0.10.0
libtpu: 0.0.40
codegen_flags: <defaults>
</compile_context>

<pallas_src>
import functools
import math

import jax
import jax.numpy as jnp
from jax.experimental import pallas as pl
from jax.experimental.pallas import tpu as pltpu


# ----------------------------- Pallas kernel ------------------------------

def _layer_scale_kernel(x_ref, g_ref, o_ref):
    # Multiply in the promoted dtype (e.g. bf16 x * f32 gamma -> f32) and cast
    # only the product back to the activation dtype.  Pure VPU work.
    o_ref[...] = (x_ref[...] * g_ref[...]).astype(o_ref.dtype)


# --------------------------- Generation probing ----------------------------

@functools.lru_cache(maxsize=1)
def _tpu_generation():
    """Best-effort probe -> (is_v7x, vmem_capacity_bytes or None)."""
    kind = ""
    try:
        kind = jax.devices()[0].device_kind.lower()
    except Exception:
        pass
    vmem_cap = None
    try:
        vmem_cap = int(pltpu.get_tpu_info().vmem_capacity_bytes)
    except Exception:
        pass
    is_v7x = ("v7" in kind) or ("tpu7" in kind) or ("tpu 7" in kind)
    return is_v7x, vmem_cap


# ------------------------------ Tiling plan --------------------------------

def _fold_factor(M, C):
    """Rows folded into the lane axis so the channel axis becomes 128-dense."""
    if C % 128 == 0:
        return 1
    k = 128 // math.gcd(C, 128)
    return k if (k > 1 and M % k == 0) else 1


def _plan_tiling(M, C, itemsize, target_block_bytes, block_rows, block_cols):
    # dtype-aware sublane alignment: 8 rows (f32), 16 (bf16), 32 (int8/fp8).
    sub_align = max(8, 32 // max(1, itemsize))

    # Lane-axis (column) tiling fallback for very wide channel dims whose full
    # row stripe alone would blow the per-buffer budget.
    if block_cols is not None:
        tn = min(int(block_cols), C)
    elif sub_align * C * itemsize > target_block_bytes:
        tn = (target_block_bytes // (sub_align * itemsize)) // 128 * 128
        tn = max(128, min(tn, C))
    else:
        tn = C

    if block_rows is not None:
        tm = min(int(block_rows), M)
    else:
        tile_row_bytes = max(1, tn * itemsize)
        tm = (target_block_bytes // tile_row_bytes) // sub_align * sub_align
        tm = max(sub_align, tm)
        if tm >= M:
            tm = M
        elif M % tm:
            # Prefer a nearby divisor of M to avoid a masked tail block.
            cand = tm
            floor = max(sub_align, tm // 2)
            while cand >= floor:
                if M % cand == 0:
                    tm = cand
                    break
                cand -= sub_align
    return tm, tn


# ----------------------------- Module wrapper ------------------------------

def layer_scale(x, gamma, *, block_rows=None, block_cols=None):
    """LayerScale forward: x * gamma, gamma broadcast over the last dim."""
    orig_shape = x.shape
    C = int(orig_shape[-1])
    assert gamma.shape == (C,), "gamma must have shape (dim,)"

    x2d = x.reshape(-1, C)                 # free reshape (no copy)
    M = int(x2d.shape[0])
    g = gamma                              # keep gamma precision (e.g. f32)

    # Lane folding: make the scale axis a multiple of 128 (unmasked vst/vld).
    k = _fold_factor(M, C)
    if k > 1:
        x2d = x2d.reshape(M // k, k * C)
        g = jnp.tile(g, k)
        M, C = M // k, k * C
    g2d = g.reshape(1, C)

    is_v7x, vmem_cap = _tpu_generation()
    if is_v7x:
        target_block_bytes = 6 * 2**20     # amortize step overhead vs 3.2 TB/s HBM
        vmem_limit = 48 * 2**20            # headroom under 64 MiB physical VMEM
        row_sem = getattr(pltpu, "CORE_PARALLEL", "parallel")   # split across 2 TCs
    else:
        target_block_bytes = 4 * 2**20
        vmem_limit = 64 * 2**20            # above v5e's 16 MiB default scoped limit
        row_sem = "parallel"
    if vmem_cap is not None:               # never request more than 3/4 of physical
        vmem_limit = min(vmem_limit, (vmem_cap * 3) // 4)

    itemsize = jnp.dtype(x.dtype).itemsize
    tm, tn = _plan_tiling(M, C, itemsize, target_block_bytes, block_rows, block_cols)

    if tn >= C:
        # Common path: 1-D grid over row tiles, full channel width per step.
        grid = (pl.cdiv(M, tm),)
        in_specs = [
            pl.BlockSpec((tm, C), lambda i: (i, 0)),   # streamed row tiles
            pl.BlockSpec((1, C), lambda i: (0, 0)),    # gamma: fetched once
        ]
        out_specs = pl.BlockSpec((tm, C), lambda i: (i, 0))
        dim_sem = (row_sem,)
    else:
        # Wide-C fallback: 2-D grid, lane axis tiled in 128-multiples.
        grid = (pl.cdiv(M, tm), pl.cdiv(C, tn))
        in_specs = [
            pl.BlockSpec((tm, tn), lambda i, j: (i, j)),
            pl.BlockSpec((1, tn), lambda i, j: (0, j)),
        ]
        out_specs = pl.BlockSpec((tm, tn), lambda i, j: (i, j))
        dim_sem = (row_sem, "parallel")

    out = pl.pallas_call(
        _layer_scale_kernel,
        out_shape=jax.ShapeDtypeStruct((M, C), x.dtype),
        grid=grid,
        in_specs=in_specs,
        out_specs=out_specs,
        compiler_params=pltpu.CompilerParams(
            dimension_semantics=dim_sem,
            vmem_limit_bytes=vmem_limit,
        ),
    )(x2d, g2d)
    return out.reshape(orig_shape)


def init_layer_scale_params(dim, init_values=1e-5, dtype=jnp.float32):
    """Matches nn.Parameter(init_values * torch.ones(dim))."""
    return {"gamma": jnp.full((dim,), init_values, dtype)}


# `inplace=True` in the PyTorch module only changes buffer reuse, not math;
# functional JAX returns a new array (XLA may still alias buffers).


if __name__ == "__main__":
    key = jax.random.PRNGKey(0)
    k1, k2, k3, k4, kg2, kg3 = jax.random.split(key, 6)

    # Case 1: module-style init (gamma = 1e-5 * ones); C=32 is not a multiple
    # of 128 -> exercises the lane-folding path ((16, 32) -> (4, 128)).
    B, L, C = 2, 8, 32
    x1 = jax.random.normal(k1, (B, L, C), jnp.float32)
    params = init_layer_scale_params(C)
    out1 = jax.block_until_ready(layer_scale(x1, params["gamma"]))
    ref1 = x1 * params["gamma"]
    assert out1.shape == x1.shape and out1.dtype == x1.dtype
    assert jnp.allclose(out1, ref1, atol=1e-6, rtol=1e-6)

    # Case 2: random gamma, C multiple of 128, forced small row tile ->
    # exercises the multi-step pipelined 1-D grid.
    B2, L2, C2 = 4, 16, 128
    x2 = jax.random.normal(k2, (B2, L2, C2), jnp.float32)
    gamma2 = jax.random.normal(kg2, (C2,), jnp.float32)
    out2 = jax.block_until_ready(layer_scale(x2, gamma2, block_rows=16))
    ref2 = x2 * gamma2
    assert jnp.allclose(out2, ref2, atol=1e-6, rtol=1e-6)

    # Case 3: forced column tiling -> exercises the wide-C 2-D grid fallback
    # (with a masked partial lane-tail block).
    M3, C3 = 32, 384
    x3 = jax.random.normal(k3, (M3, C3), jnp.float32)
    gamma3 = jax.random.normal(kg3, (C3,), jnp.float32)
    out3 = jax.block_until_ready(
        layer_scale(x3, gamma3, block_rows=16, block_cols=256))
    ref3 = x3 * gamma3
    assert jnp.allclose(out3, ref3, atol=1e-6, rtol=1e-6)

    # Case 4: bf16 activations with f32 gamma (product cast only) + folding.
    B4, L4, C4 = 2, 8, 64
    x4 = jax.random.normal(k4, (B4, L4, C4), jnp.float32).astype(jnp.bfloat16)
    gamma4 = init_layer_scale_params(C4)["gamma"]            # float32
    out4 = jax.block_until_ready(layer_scale(x4, gamma4))
    ref4 = (x4.astype(jnp.float32) * gamma4).astype(jnp.bfloat16)
    assert out4.dtype == jnp.bfloat16
    assert jnp.allclose(out4.astype(jnp.float32), ref4.astype(jnp.float32),
                        rtol=1e-2, atol=1e-8)

    print("KERNEL_OK")
</pallas_src>

<mosaic_0001>
module attributes {stable_mosaic.version = 11 : i64} {
  func.func @_layer_scale_kernel(%arg0: i32, %arg1: memref<4x128xf32, #tpu.memory_space<vmem>>, %arg2: memref<1x128xf32, #tpu.memory_space<vmem>>, %arg3: memref<4x128xf32, #tpu.memory_space<vmem>>) attributes {dimension_semantics = [#tpu.dimension_semantics<parallel>], iteration_bounds = array<i64: 1>, scalar_prefetch = 0 : i64, scratch_operands = 0 : i64, tpu.core_type = #tpu.core_type<tc>, window_params = [{transform_indices = @transform_0, window_bounds = array<i64: 4, 128>}, {pipeline_mode = #tpu.pipeline_mode<synchronous>, transform_indices = @transform_1, window_bounds = array<i64: 1, 128>}, {transform_indices = @transform_2, window_bounds = array<i64: 4, 128>}]} {
    %c0 = arith.constant 0 : index
    %c0_0 = arith.constant 0 : index
    %0 = vector.load %arg1[%c0, %c0_0] : memref<4x128xf32, #tpu.memory_space<vmem>>, vector<4x128xf32>
    %c0_1 = arith.constant 0 : index
    %c0_2 = arith.constant 0 : index
    %1 = vector.load %arg2[%c0_1, %c0_2] : memref<1x128xf32, #tpu.memory_space<vmem>>, vector<1x128xf32>
    %2 = vector.broadcast %1 : vector<1x128xf32> to vector<4x128xf32>
    %3 = arith.mulf %0, %2 : vector<4x128xf32>
    %c0_3 = arith.constant 0 : index
    %c0_4 = arith.constant 0 : index
    %4 = vector.load %arg3[%c0_3, %c0_4] : memref<4x128xf32, #tpu.memory_space<vmem>>, vector<4x128xf32>
    tpu.vector_store %arg3[%c0_3, %c0_4], %3 {strides = array<i32>} : memref<4x128xf32, #tpu.memory_space<vmem>>, vector<4x128xf32>,
    return
  }
  func.func @transform_0(%arg0: i32) -> (i32, i32) {
    %c0_i32 = arith.constant 0 : i32
    %c0_i32_0 = arith.constant 0 : i32
    return %arg0, %c0_i32 : i32, i32
  }
  func.func @transform_1(%arg0: i32) -> (i32, i32) {
    %c0_i32 = arith.constant 0 : i32
    %c0_i32_0 = arith.constant 0 : i32
    %c0_i32_1 = arith.constant 0 : i32
    return %c0_i32, %c0_i32_0 : i32, i32
  }
  func.func @transform_2(%arg0: i32) -> (i32, i32) {
    %c0_i32 = arith.constant 0 : i32
    %c0_i32_0 = arith.constant 0 : i32
    return %arg0, %c0_i32 : i32, i32
  }
}

</mosaic_0001>

<llo_original>
// kernel: tpu_custom_call.1
$region0: #{tpu_custom_call.1}
  #allocation0 [shape = 'u32[]', space=smem, size = 0x4, offset = 0x4, fixed_abs, tag = 'smem constant byte address 0x4 - core index']
  #allocation1 [shape = 'u32[72,128]{1,0:T(1,128)}', space=vmem, size = 0x9000, scoped, tag = 'internal scratch']
  %s0 = inlined_call_operand.hbm [shape: f32[4,128], index: 0, kind: input, shape index: {}]
  %s1 = inlined_call_operand.hbm [shape: f32[1,128], index: 1, kind: input, shape index: {}]
  %s2 = inlined_call_operand.hbm [shape: f32[4,128], index: 2, kind: output, shape index: {}]
  %s3 = sld [smem:[#allocation0]]
  $region26: #{tpu_custom_call.1} parent=0
    _
  %s5 = ssub.s32 1, %s3
  %s6 = scalar_select 0, %s5, %s3
  $region1: #{tpu_custom_call.1} parent=0
    #allocation2 [shape = 'u8[2048]{0}', space=vmem, size = 0x800, scoped, tag = 'input window, operand 0, single buffered']
    #allocation3 [shape = 's32[1]{0}', space=sflag, size = 0x4, scoped, tag = 'scoped memory for tpu_custom_call.1']
    #allocation4 [shape = 's32[1]{0}', space=sflag, size = 0x4, scoped, tag = 'scoped memory for tpu_custom_call.1']
    #allocation5 [shape = 'u8[512]{0}', space=vmem, size = 0x400, scoped, tag = 'input window, operand 1, single buffered']
    #allocation6 [shape = 's32[1]{0}', space=sflag, size = 0x4, scoped, tag = 'scoped memory for tpu_custom_call.1']
    #allocation7 [shape = 'u8[2048]{0}', space=vmem, size = 0x800, scoped, tag = 'output window, operand 0, single buffered']
    %7 = vsyncpa [#allocation3], 0
    %8 = vsyncpa [#allocation6], 0
    %9 = vsyncpa [#allocation4], 0
    // Predicated region
    $region2: #{tpu_custom_call.1} parent=1 // pred_check
      _
    $region3: #{tpu_custom_call.1} parent=1 // pred_check_branch
      %11 = sbr.rel (0) target = $region5
    $region4: #{tpu_custom_call.1} parent=1 // pred_region
      %13 = vsyncadd [#allocation3], 0
      %s15 = sshll.u32 %s0, 4
      %s16 = int_to_ptr.hbm [resolvable:$true] %s15
      %s17 = sshll.u32 [#allocation2], 4
      %s18 = int_to_ptr.vmem [resolvable:$true] %s17
      %20 = dma.hbm_to_vmem [thread:$0]  %s16, 64, %s18, [#allocation3]
    $region5: #{tpu_custom_call.1} parent=1 // pred_fallthru
      _
    // Predicated region
    $region6: #{tpu_custom_call.1} parent=1 // pred_check
      _
    $region7: #{tpu_custom_call.1} parent=1 // pred_check_branch
      %22 = sbr.rel (0) target = $region9
    $region8: #{tpu_custom_call.1} parent=1 // pred_region
      %24 = vsyncadd [#allocation6], 0
      %s26 = sshll.u32 %s1, 4
      %s27 = int_to_ptr.hbm [resolvable:$true] %s26
      %s28 = sshll.u32 [#allocation5], 4
      %s29 = int_to_ptr.vmem [resolvable:$true] %s28
      %31 = dma.hbm_to_vmem [thread:$0]  %s27, 16, %s29, [#allocation6]
    $region9: #{tpu_custom_call.1} parent=1 // pred_fallthru
      _
    // Predicated region
    $region10: #{tpu_custom_call.1} parent=1 // pred_check
      _
    $region11: #{tpu_custom_call.1} parent=1 // pred_check_branch
      %33 = sbr.rel (0) target = $region13
    $region12: #{tpu_custom_call.1} parent=1 // pred_region
      %35 = dma.done [#allocation3], 64
    $region13: #{tpu_custom_call.1} parent=1 // pred_fallthru
      _
    // Predicated region
    $region14: #{tpu_custom_call.1} parent=1 // pred_check
      _
    $region15: #{tpu_custom_call.1} parent=1 // pred_check_branch
      %37 = sbr.rel (0) target = $region17
    $region16: #{tpu_custom_call.1} parent=1 // pred_region
      %39 = dma.done [#allocation6], 16
    $region17: #{tpu_custom_call.1} parent=1 // pred_fallthru
      _
    %v40 = vld [vmem:[#allocation2] sm:$0xf]
    %v41 = vld [vmem:[#allocation5] sm:$0x1]
    %v43 = vperm.slane %v41, 0
    %v45 = vmul.f32 %v40, %v43
    %46 = vst [vmem:[#allocation7] sm:$0xf] %v45
    // Predicated region
    $region18: #{tpu_custom_call.1} parent=1 // pred_check
      _
    $region19: #{tpu_custom_call.1} parent=1 // pred_check_branch
      %48 = sbr.rel (0) target = $region21
    $region20: #{tpu_custom_call.1} parent=1 // pred_region
      %50 = vsyncadd [#allocation4], 0
      %s52 = sshll.u32 [#allocation7], 4
      %s53 = int_to_ptr.vmem [resolvable:$true] %s52
      %s54 = sshll.u32 %s2, 4
      %s55 = int_to_ptr.hbm [resolvable:$true] %s54
      %57 = dma.vmem_to_hbm [thread:$0]  %s53, 64, %s55, [#allocation4]
    $region21: #{tpu_custom_call.1} parent=1 // pred_fallthru
      _
    // Predicated region
    $region22: #{tpu_custom_call.1} parent=1 // pred_check
      _
    $region23: #{tpu_custom_call.1} parent=1 // pred_check_branch
      %59 = sbr.rel (0) target = $region25
    $region24: #{tpu_custom_call.1} parent=1 // pred_region
      %61 = dma.done [#allocation4], 64
    $region25: #{tpu_custom_call.1} parent=1 // pred_fallthru
      _
    %62 = vsyncpa [#allocation3], 1
    %63 = vsyncpa [#allocation6], 1
    %64 = vsyncpa [#allocation4], 1

</llo_original>
